<compile_context>
chip_gen: v7x
topology: tpu7x:2x2x1
jax: 0.10.0
libtpu: 0.0.40
codegen_flags: <defaults>
</compile_context>

<pallas_src>
import math

import jax
import jax.numpy as jnp
from jax.experimental import pallas as pl
from jax.experimental.pallas import tpu as pltpu

EPS = 1e-12  # F.normalize default eps


def conhead_kernel(x_ref, wt_ref, b_ref, o_ref, acc_ref):
    k = pl.program_id(1)

    @pl.when(k == 0)
    def _():
        # Seed the accumulator with the broadcast bias (removes the separate
        # tile_b x out_dim VPU add from the finalize step).
        acc_ref[...] = jnp.broadcast_to(
            b_ref[...].astype(jnp.float32), acc_ref.shape)

    # x_ref: [tile_b, tile_k], wt_ref: [tile_k, out_dim] -> plain [M,K]@[K,N]
    # MXU contraction with f32 accumulation (no transposed-RHS dot_general).
    acc_ref[...] += jnp.dot(x_ref[...], wt_ref[...],
                            preferred_element_type=jnp.float32)

    @pl.when(k == pl.num_programs(1) - 1)
    def _():
        y = acc_ref[...]                                    # [tile_b, out_dim]
        # F.normalize(p=2, dim=1): y / max(||y||, eps) == y * rsqrt(max(ss, eps^2))
        sum_sq = jnp.sum(y * y, axis=-1, keepdims=True)
        inv_norm = jax.lax.rsqrt(jnp.maximum(sum_sq, EPS * EPS))
        o_ref[...] = (y * inv_norm).astype(o_ref.dtype)


def _vmem_capacity_bytes():
    try:
        return int(pltpu.get_tpu_info().vmem_capacity_bytes)
    except Exception:
        return 64 << 20  # conservative fallback: v7x per-TensorCore VMEM


def _pick_tile_k(in_dim, out_dim, w_itemsize, weight_budget_bytes):
    """K tile for the streamed reduction.

    Prefer whole K (nk == 1): the weight is then fetched from HBM exactly once,
    the MXU accumulates internally, and the f32 scratch is read-modify-written
    once per B tile instead of once per K step (matters most on v5e's single
    vector-store slot).  The bound is the *double-buffered resident block*,
    not the total weight.
    """
    if 2 * in_dim * out_dim * w_itemsize <= weight_budget_bytes:
        return in_dim
    # Stream lane-aligned (128-multiple) K slices that divide in_dim exactly
    # (the reduction axis must never pick up padded garbage).
    t = (in_dim // 128) * 128
    while t >= 128:
        if in_dim % t == 0 and 2 * t * out_dim * w_itemsize <= weight_budget_bytes:
            return t
        t -= 128
    # TODO(synk): for extremely large out_dim even a 128-wide K slice may not
    # fit; that regime needs out_dim tiling + two-pass normalization.
    return in_dim


def _pick_tile_b(B, tile_k, out_dim, x_itemsize, out_itemsize, budget_bytes):
    """Largest MXU-friendly B tile whose per-tile buffers fit `budget_bytes`,
    with >= 2 tiles for large batches so v7x's two TensorCores both get work."""
    def tile_bytes(t):
        return (2 * t * tile_k * x_itemsize        # double-buffered x block
                + 2 * t * out_dim * out_itemsize   # double-buffered out block
                + t * out_dim * 4)                 # f32 accumulator scratch

    if B <= 8:
        return B  # full-dim block is always layout-legal

    tile = 8
    for t in (1024, 512, 256, 128, 64, 32, 16, 8):
        if t <= B and tile_bytes(t) <= budget_bytes:
            tile = t
            break

    # v7x megacore: make the "parallel" B axis have >= 2 blocks when the batch
    # is big enough that duplicating the weight DMA per core is worth it.
    if B >= 256 and pl.cdiv(B, tile) < 2:
        tile = max(8, ((pl.cdiv(B, 2) + 7) // 8) * 8)
    return tile


def conhead_forward(x, weight, bias):
    """x: [B, in_dim]; weight: [out_dim, in_dim] (PyTorch layout); bias: [out_dim]."""
    B, in_dim = x.shape
    out_dim = weight.shape[0]

    # One-time parameter-layout transform (amortized / constant-folded for
    # frozen params under jit): [in_dim, out_dim] so the kernel dot needs no
    # per-step XLU transpose of the weight block.
    w_t = jnp.transpose(weight)
    b2 = bias.reshape(1, out_dim)

    # Generation-aware VMEM budgeting (64 MiB/TC on v7x, 128 MiB on v5e/v6e).
    vmem_cap = _vmem_capacity_bytes()
    budget = int(0.75 * vmem_cap)

    x_isz = x.dtype.itemsize
    w_isz = w_t.dtype.itemsize
    min_b = min(B, 8)
    # Reserve room for the smallest legal B tile + bias before handing the
    # rest of the budget to the resident weight block.
    reserve = (2 * min_b * in_dim * x_isz
               + 2 * min_b * out_dim * x_isz
               + min_b * out_dim * 4
               + 2 * out_dim * bias.dtype.itemsize
               + (1 << 20))
    weight_budget = max(budget - reserve, budget // 2)

    tile_k = _pick_tile_k(in_dim, out_dim, w_isz, weight_budget)
    b_budget = budget - reserve - 2 * tile_k * out_dim * w_isz
    tile_b = _pick_tile_b(B, tile_k, out_dim, x_isz, x_isz, b_budget)

    nb = pl.cdiv(B, tile_b)
    nk = in_dim // tile_k

    # NOTE(perf-review): pipeline_mode=pl.Buffered(1) on the constant-index
    # weight block (when nk == 1) and on the bias would halve their VMEM
    # footprint; omitted for portability across jax builds -- the budget math
    # above already assumes the default double buffer, so sizing stays legal.

    vmem_need = (2 * tile_b * tile_k * x_isz
                 + 2 * tile_k * out_dim * w_isz
                 + 2 * tile_b * out_dim * x_isz
                 + tile_b * out_dim * 4
                 + 2 * out_dim * bias.dtype.itemsize)
    vmem_limit = int(min(max(int(1.25 * vmem_need), 32 << 20), vmem_cap))

    # Weight is re-streamed once per B tile only when K is streamed (nk > 1).
    weight_reads = nb if nk > 1 else 1
    cost = pl.CostEstimate(
        flops=2 * B * in_dim * out_dim,
        transcendentals=B,  # one rsqrt per row
        bytes_accessed=(x.size * x_isz
                        + weight_reads * w_t.size * w_isz
                        + bias.size * bias.dtype.itemsize
                        + B * out_dim * x_isz))

    return pl.pallas_call(
        conhead_kernel,
        out_shape=jax.ShapeDtypeStruct((B, out_dim), x.dtype),
        grid_spec=pltpu.PrefetchScalarGridSpec(
            num_scalar_prefetch=0,
            grid=(nb, nk),
            in_specs=[
                pl.BlockSpec((tile_b, tile_k), lambda i, k: (i, k)),    # x
                pl.BlockSpec((tile_k, out_dim), lambda i, k: (k, 0)),   # weight (resident when nk==1)
                pl.BlockSpec((1, out_dim), lambda i, k: (0, 0)),        # bias
            ],
            out_specs=pl.BlockSpec((tile_b, out_dim), lambda i, k: (i, 0)),
            scratch_shapes=[pltpu.VMEM((tile_b, out_dim), jnp.float32)],
        ),
        compiler_params=pltpu.CompilerParams(
            dimension_semantics=("parallel", "arbitrary"),
            vmem_limit_bytes=vmem_limit,
        ),
        cost_estimate=cost,
    )(x, w_t, b2)


def conhead_reference(x, weight, bias):
    y = x.astype(jnp.float32) @ weight.astype(jnp.float32).T + bias.astype(jnp.float32)
    norm = jnp.sqrt(jnp.sum(y * y, axis=1, keepdims=True))
    return (y / jnp.maximum(norm, EPS)).astype(x.dtype)


if __name__ == "__main__":
    key = jax.random.PRNGKey(0)
    kx, kw, kb = jax.random.split(key, 3)

    B, in_dim, out_dim = 8, 32, 128

    x = jax.random.normal(kx, (B, in_dim), dtype=jnp.float32)
    # Deterministic "init" mimicking nn.Linear's uniform(-1/sqrt(in), 1/sqrt(in))
    bound = 1.0 / math.sqrt(in_dim)
    weight = jax.random.uniform(kw, (out_dim, in_dim), minval=-bound,
                                maxval=bound, dtype=jnp.float32)
    bias = jax.random.uniform(kb, (out_dim,), minval=-bound, maxval=bound,
                              dtype=jnp.float32)

    out = conhead_forward(x, weight, bias)
    out = jax.block_until_ready(out)

    ref = conhead_reference(x, weight, bias)
    assert out.shape == (B, out_dim)
    assert jnp.allclose(out, ref, atol=1e-5, rtol=1e-5), "mismatch vs reference"

    print("KERNEL_OK")
</pallas_src>

<mosaic_0001>
module attributes {stable_mosaic.version = 11 : i64} {
  func.func @conhead_kernel(%arg0: i32, %arg1: i32, %arg2: memref<8x32xf32, #tpu.memory_space<vmem>>, %arg3: memref<32x128xf32, #tpu.memory_space<vmem>>, %arg4: memref<1x128xf32, #tpu.memory_space<vmem>>, %arg5: memref<8x128xf32, #tpu.memory_space<vmem>>, %arg6: memref<8x128xf32, #tpu.memory_space<vmem>>) attributes {dimension_semantics = [#tpu.dimension_semantics<parallel>, #tpu.dimension_semantics<arbitrary>], iteration_bounds = array<i64: 1, 1>, scalar_prefetch = 0 : i64, scratch_operands = 1 : i64, tpu.core_type = #tpu.core_type<tc>, window_params = [{transform_indices = @transform_0, window_bounds = array<i64: 8, 32>}, {transform_indices = @transform_1, window_bounds = array<i64: 32, 128>}, {pipeline_mode = #tpu.pipeline_mode<synchronous>, transform_indices = @transform_2, window_bounds = array<i64: 1, 128>}, {transform_indices = @transform_3, window_bounds = array<i64: 8, 128>}]} {
    %c0_i32 = arith.constant 0 : i32
    %0 = arith.cmpi eq, %arg1, %c0_i32 : i32
    %1 = arith.extui %0 : i1 to i32
    %c0_i32_0 = arith.constant 0 : i32
    %2 = arith.cmpi ne, %1, %c0_i32_0 : i32
    scf.if %2 {
      %c0_10 = arith.constant 0 : index
      %c0_11 = arith.constant 0 : index
      %12 = vector.load %arg4[%c0_10, %c0_11] : memref<1x128xf32, #tpu.memory_space<vmem>>, vector<1x128xf32>
      %13 = vector.shape_cast %12 : vector<1x128xf32> to vector<1x128xf32>
      %14 = vector.broadcast %13 : vector<1x128xf32> to vector<8x128xf32>
      %c0_12 = arith.constant 0 : index
      %c0_13 = arith.constant 0 : index
      %15 = vector.load %arg6[%c0_12, %c0_13] : memref<8x128xf32, #tpu.memory_space<vmem>>, vector<8x128xf32>
      tpu.vector_store %arg6[%c0_12, %c0_13], %14 {strides = array<i32>} : memref<8x128xf32, #tpu.memory_space<vmem>>, vector<8x128xf32>,
    } else {
    }
    %c0 = arith.constant 0 : index
    %c0_1 = arith.constant 0 : index
    %3 = vector.load %arg6[%c0, %c0_1] : memref<8x128xf32, #tpu.memory_space<vmem>>, vector<8x128xf32>
    %c0_2 = arith.constant 0 : index
    %c0_3 = arith.constant 0 : index
    %4 = vector.load %arg2[%c0_2, %c0_3] : memref<8x32xf32, #tpu.memory_space<vmem>>, vector<8x32xf32>
    %c0_4 = arith.constant 0 : index
    %c0_5 = arith.constant 0 : index
    %5 = vector.load %arg3[%c0_4, %c0_5] : memref<32x128xf32, #tpu.memory_space<vmem>>, vector<32x128xf32>
    %cst = arith.constant dense<0.000000e+00> : vector<8x128xf32>
    %6 = tpu.matmul %4, %5, %cst {dimension_numbers = #tpu.dot_dimension_numbers<[1], [0], [0], [1], [0, 0, 1, 1], [], []>} : vector<8x32xf32>, vector<32x128xf32>, vector<8x128xf32> -> vector<8x128xf32>
    %7 = arith.addf %3, %6 : vector<8x128xf32>
    %c0_6 = arith.constant 0 : index
    %c0_7 = arith.constant 0 : index
    %8 = vector.load %arg6[%c0_6, %c0_7] : memref<8x128xf32, #tpu.memory_space<vmem>>, vector<8x128xf32>
    tpu.vector_store %arg6[%c0_6, %c0_7], %7 {strides = array<i32>} : memref<8x128xf32, #tpu.memory_space<vmem>>, vector<8x128xf32>,
    %c0_i32_8 = arith.constant 0 : i32
    %9 = arith.cmpi eq, %arg1, %c0_i32_8 : i32
    %10 = arith.extui %9 : i1 to i32
    %c0_i32_9 = arith.constant 0 : i32
    %11 = arith.cmpi ne, %10, %c0_i32_9 : i32
    scf.if %11 {
      %c0_10 = arith.constant 0 : index
      %c0_11 = arith.constant 0 : index
      %12 = vector.load %arg6[%c0_10, %c0_11] : memref<8x128xf32, #tpu.memory_space<vmem>>, vector<8x128xf32>
      %13 = arith.mulf %12, %12 : vector<8x128xf32>
      %cst_12 = arith.constant dense<0.000000e+00> : vector<8xf32>
      %14 = vector.multi_reduction <add>, %13, %cst_12 [1] : vector<8x128xf32> to vector<8xf32>
      %15 = vector.shape_cast %14 : vector<8xf32> to vector<8x1xf32>
      %cst_13 = arith.constant 1.000000e-24 : f32
      %16 = vector.broadcast %cst_13 : f32 to vector<8x1xf32>
      %17 = arith.maximumf %15, %16 : vector<8x1xf32>
      %18 = math.rsqrt %17 : vector<8x1xf32>
      %19 = vector.broadcast %18 : vector<8x1xf32> to vector<8x128xf32>
      %20 = arith.mulf %12, %19 : vector<8x128xf32>
      %c0_14 = arith.constant 0 : index
      %c0_15 = arith.constant 0 : index
      %21 = vector.load %arg5[%c0_14, %c0_15] : memref<8x128xf32, #tpu.memory_space<vmem>>, vector<8x128xf32>
      tpu.vector_store %arg5[%c0_14, %c0_15], %20 {strides = array<i32>} : memref<8x128xf32, #tpu.memory_space<vmem>>, vector<8x128xf32>,
    } else {
    }
    return
  }
  func.func @transform_0(%arg0: i32, %arg1: i32) -> (i32, i32) {
    %c0_i32 = arith.constant 0 : i32
    return %arg0, %arg1 : i32, i32
  }
  func.func @transform_1(%arg0: i32, %arg1: i32) -> (i32, i32) {
    %c0_i32 = arith.constant 0 : i32
    %c0_i32_0 = arith.constant 0 : i32
    return %arg1, %c0_i32 : i32, i32
  }
  func.func @transform_2(%arg0: i32, %arg1: i32) -> (i32, i32) {
    %c0_i32 = arith.constant 0 : i32
    %c0_i32_0 = arith.constant 0 : i32
    %c0_i32_1 = arith.constant 0 : i32
    return %c0_i32, %c0_i32_0 : i32, i32
  }
  func.func @transform_3(%arg0: i32, %arg1: i32) -> (i32, i32) {
    %c0_i32 = arith.constant 0 : i32
    %c0_i32_0 = arith.constant 0 : i32
    return %arg0, %c0_i32 : i32, i32
  }
}

</mosaic_0001>

<llo_original>
// kernel: tpu_custom_call.1
$region0: #{tpu_custom_call.1}
  #allocation0 [shape = 'u32[]', space=smem, size = 0x4, offset = 0x4, fixed_abs, tag = 'smem constant byte address 0x4 - core index']
  #allocation1 [shape = 'u32[144,128]{1,0:T(1,128)}', space=vmem, size = 0x12000, scoped, tag = 'internal scratch']
  #allocation2 [shape = 'f32[8,128]{1,0:T(8,128)}', space=vmem, size = 0x1000, scoped, tag = 'scratch operand']
  %s0 = inlined_call_operand.hbm [shape: f32[8,32], index: 0, kind: input, shape index: {}]
  %s1 = inlined_call_operand.hbm [shape: f32[32,128], index: 1, kind: input, shape index: {}]
  %s2 = inlined_call_operand.vmem [shape: f32[1,128], index: 2, kind: input, shape index: {}]
  %s3 = inlined_call_operand.hbm [shape: f32[8,128], index: 3, kind: output, shape index: {}]
  %s4 = sld [smem:[#allocation0]]
  $region38: #{tpu_custom_call.1} parent=0
    _
  %s6 = ssub.s32 1, %s4
  %s7 = scalar_select 0, %s6, %s4
  $region1: #{tpu_custom_call.1} parent=0
    #allocation3 [shape = 'u8[4096]{0}', space=vmem, size = 0x1000, scoped, tag = 'input window, operand 0, single buffered']
    #allocation4 [shape = 's32[1]{0}', space=sflag, size = 0x4, scoped, tag = 'scoped memory for tpu_custom_call.1']
    #allocation5 [shape = 's32[1]{0}', space=sflag, size = 0x4, scoped, tag = 'scoped memory for tpu_custom_call.1']
    #allocation6 [shape = 'u8[16384]{0}', space=vmem, size = 0x4000, scoped, tag = 'input window, operand 1, single buffered']
    #allocation7 [shape = 's32[1]{0}', space=sflag, size = 0x4, scoped, tag = 'scoped memory for tpu_custom_call.1']
    #allocation8 [shape = 'u8[4096]{0}', space=vmem, size = 0x1000, scoped, tag = 'output window, operand 0, single buffered']
    %8 = vsyncpa [#allocation4], 0
    %9 = vsyncpa [#allocation7], 0
    %10 = vsyncpa [#allocation5], 0
    // Predicated region
    $region2: #{tpu_custom_call.1} parent=1 // pred_check
      _
    $region3: #{tpu_custom_call.1} parent=1 // pred_check_branch
      %12 = sbr.rel (0) target = $region5
    $region4: #{tpu_custom_call.1} parent=1 // pred_region
      %s14 = ssub.s32 128, 128
      %15 = vsyncadd [#allocation4], %s14
      %s17 = sshll.u32 [#allocation3], 4
      %s18 = int_to_ptr.vmem [resolvable:$true] %s17
      %20 = dma.hbm_to_vmem [thread:$0]  %s0, 128, %s18, [#allocation4]
    $region5: #{tpu_custom_call.1} parent=1 // pred_fallthru
      _
    // Predicated region
    $region6: #{tpu_custom_call.1} parent=1 // pred_check
      _
    $region7: #{tpu_custom_call.1} parent=1 // pred_check_branch
      %22 = sbr.rel (0) target = $region9
    $region8: #{tpu_custom_call.1} parent=1 // pred_region
      %s24 = ssub.s32 512, 512
      %25 = vsyncadd [#allocation7], %s24
      %s26 = sshll.u32 [#allocation6], 4
      %s27 = int_to_ptr.vmem [resolvable:$true] %s26
      %32 = dma.hbm_to_vmem [thread:$0]  %s1, 512, %s27, [#allocation7], 128, 128, 8
    $region9: #{tpu_custom_call.1} parent=1 // pred_fallthru
      _
    // Predicated region
    $region10: #{tpu_custom_call.1} parent=1 // pred_check
      _
    $region11: #{tpu_custom_call.1} parent=1 // pred_check_branch
      %34 = sbr.rel (0) target = $region13
    $region12: #{tpu_custom_call.1} parent=1 // pred_region
      _
    $region13: #{tpu_custom_call.1} parent=1 // pred_fallthru
      _
    // Predicated region
    $region14: #{tpu_custom_call.1} parent=1 // pred_check
      _
    $region15: #{tpu_custom_call.1} parent=1 // pred_check_branch
      %36 = sbr.rel (0) target = $region17
    $region16: #{tpu_custom_call.1} parent=1 // pred_region
      %37 = dma.done [#allocation4], 128
    $region17: #{tpu_custom_call.1} parent=1 // pred_fallthru
      _
    // Predicated region
    $region18: #{tpu_custom_call.1} parent=1 // pred_check
      _
    $region19: #{tpu_custom_call.1} parent=1 // pred_check_branch
      %39 = sbr.rel (0) target = $region21
    $region20: #{tpu_custom_call.1} parent=1 // pred_region
      %40 = dma.done [#allocation7], 512
    $region21: #{tpu_custom_call.1} parent=1 // pred_fallthru
      _
    %p41 = scmp.eq.s32.totalorder 0, 0
    // Predicated region
    $region22: #{tpu_custom_call.1} parent=1 // pred_check
      %p42 = pneg %p41
    $region23: #{tpu_custom_call.1} parent=1 // pred_check_branch
      %44 = sbr.rel (%p42) target = $region25
    $region24: #{tpu_custom_call.1} parent=1 // pred_region
      %v45 = vld [vmem:[%s2] sm:$0x1]
      %v47 = vlaneseq
      %v48 = vshrl.u32 %v47, 7
      %v49 = vsub.s32 0, %v48
      %v50 = vrot.slane %v45, %v49
      %52 = vst [vmem:[#allocation2] sm:$0xff] %v50
    $region25: #{tpu_custom_call.1} parent=1 // pred_fallthru
      _
    %v53 = vld [vmem:[#allocation2] sm:$0xff]
    %v54 = vld [vmem:[#allocation3] sm:$0xff]
    %v55 = vld [vmem:[#allocation6] sm:$0xff]
    %v56 = vld [vmem:[#allocation6 + $0x8] sm:$0xff]
    %v57 = vld [vmem:[#allocation6 + $0x10] sm:$0xff]
    %v58 = vld [vmem:[#allocation6 + $0x18] sm:$0xff]
    %vm59 = vcmask 261120
    %v61 = vsel %vm59, %v54, 0
    %63 = vmatprep.subr.mxu0 0.0
    %64 = vmatpush1.msra.mxu0 %v55
    %65 = vmatprep.subr.mxu0 0.0
    %66 = vmatpush1.msra.mxu0 %v56
    %67 = vmatprep.subr.mxu0 0.0
    %68 = vmatpush1.msra.mxu0 %v57
    %69 = vmatprep.subr.mxu0 0.0
    %70 = vmatpush1.msra.mxu0 %v58
    %71 = vmatprep.subr.mxu0 0.0
    %72 = vmatpush1.msra.mxu0 0.0
    %73 = vmatprep.subr.mxu0 0.0
    %74 = vmatpush1.msra.mxu0 0.0
    %75 = vmatprep.subr.mxu0 0.0
    %76 = vmatpush1.msra.mxu0 0.0
    %77 = vmatprep.subr.mxu0 0.0
    %78 = vmatpush1.msra.mxu0 0.0
    %79 = vmatprep.subr.mxu0 0.0
    %80 = vmatpush1.msra.mxu0 0.0
    %81 = vmatprep.subr.mxu0 0.0
    %82 = vmatpush1.msra.mxu0 0.0
    %83 = vmatprep.subr.mxu0 0.0
    %84 = vmatpush1.msra.mxu0 0.0
    %85 = vmatprep.subr.mxu0 0.0
    %86 = vmatpush1.msra.mxu0 0.0
    %87 = vmatprep.subr.mxu0 0.0
    %88 = vmatpush1.msra.mxu0 0.0
    %89 = vmatprep.subr.mxu0 0.0
    %90 = vmatpush1.msra.mxu0 0.0
    %91 = vmatprep.subr.mxu0 0.0
    %92 = vmatpush1.msra.mxu0 0.0
    %93 = vmatprep.subr.mxu0 0.0
    %94 = vmatpush1.msra.mxu0 0.0
    %95 = vmatprep.subr.mxu0 0.0
    %96 = vmatpush1.msra.mxu0 0.0
    %97 = vmatprep.subr.mxu0 0.0
    %98 = vmatpush1.msra.mxu0 0.0
    %99 = vmatprep.subr.mxu0 0.0
    %100 = vmatpush1.msra.mxu0 0.0
    %101 = vmatprep.subr.mxu0 0.0
    %102 = vmatpush1.msra.mxu0 0.0
    %103 = vmatprep.subr.mxu0 0.0
    %104 = vmatpush1.msra.mxu0 0.0
    %105 = vmatprep.subr.mxu0 0.0
    %106 = vmatpush1.msra.mxu0 0.0
    %107 = vmatprep.subr.mxu0 0.0
    %108 = vmatpush1.msra.mxu0 0.0
    %109 = vmatprep.subr.mxu0 0.0
    %110 = vmatpush1.msra.mxu0 0.0
    %111 = vmatprep.subr.mxu0 0.0
    %112 = vmatpush1.msra.mxu0 0.0
    %113 = vmatprep.subr.mxu0 0.0
    %114 = vmatpush1.msra.mxu0 0.0
    %115 = vmatprep.subr.mxu0 0.0
    %116 = vmatpush1.msra.mxu0 0.0
    %117 = vmatprep.subr.mxu0 0.0
    %118 = vmatpush1.msra.mxu0 0.0
    %119 = vmatprep.subr.mxu0 0.0
    %120 = vmatpush1.msra.mxu0 0.0
    %121 = vmatprep.subr.mxu0 0.0
    %122 = vmatpush1.msra.mxu0 0.0
    %123 = vmatprep.subr.mxu0 0.0
    %124 = vmatpush1.msra.mxu0 0.0
    %125 = vmatprep.subr.mxu0 0.0
    %126 = vmatpush1.msra.mxu0 0.0
    %127 = vmatprep.mubr.f32.mxu0 0.0
    %128 = vmatmul.mubr.f32.gmra.mrb[0].mxu0 %v61
    %v129 = vpop.f32.mrb[0].mxu0
    %v130 = vadd.f32 0.0, %v129
    %v131 = vpop.f32.mrb[0].mxu0
    %132 = vdwg.mxu0
    %v133 = vadd.f32 %v53, %v130
    %134 = vst [vmem:[#allocation2] sm:$0xff] %v133
    // Predicated region
    $region26: #{tpu_custom_call.1} parent=1 // pred_check
      %p135 = pneg %p41
    $region27: #{tpu_custom_call.1} parent=1 // pred_check_branch
      %137 = sbr.rel (%p135) target = $region29
    $region28: #{tpu_custom_call.1} parent=1 // pred_region
      %v138 = vld [vmem:[#allocation2] sm:$0xff]
      %v139 = vmul.f32 %v138, %v138
      %140 = vadd.xlane.f32.xlu0 %v139
      %v141 = vpop.xlane.xlu0 %140
      %v142 = vmax.f32 %v141, 1e-24
      %v143 = vrsqrt.pop %v142
      %v144 = vmul.f32 %v138, %v143
      %145 = vst [vmem:[#allocation8] sm:$0xff] %v144
    $region29: #{tpu_custom_call.1} parent=1 // pred_fallthru
      _
    // Predicated region
    $region30: #{tpu_custom_call.1} parent=1 // pred_check
      _
    $region31: #{tpu_custom_call.1} parent=1 // pred_check_branch
      %147 = sbr.rel (0) target = $region33
    $region32: #{tpu_custom_call.1} parent=1 // pred_region
      %s149 = ssub.s32 128, 128
      %150 = vsyncadd [#allocation5], %s149
      %s152 = sshll.u32 [#allocation8], 4
      %s153 = int_to_ptr.vmem [resolvable:$true] %s152
      %155 = dma.vmem_to_hbm [thread:$0]  %s153, 128, %s3, [#allocation5]
    $region33: #{tpu_custom_call.1} parent=1 // pred_fallthru
      _
    // Predicated region
    $region34: #{tpu_custom_call.1} parent=1 // pred_check
      _
    $region35: #{tpu_custom_call.1} parent=1 // pred_check_branch
      %157 = sbr.rel (0) target = $region37
    $region36: #{tpu_custom_call.1} parent=1 // pred_region
      %158 = dma.done [#allocation5], 128
    $region37: #{tpu_custom_call.1} parent=1 // pred_fallthru
      _
    %159 = vsyncpa [#allocation4], 1
    %160 = vsyncpa [#allocation7], 1
    %161 = vsyncpa [#allocation5], 1

</llo_original>
